<compile_context>
chip_gen: v6e
topology: v6e:2x2x1
jax: 0.10.0
libtpu: 0.0.40
codegen_flags: <defaults>
</compile_context>

<pallas_src>
import functools

import jax
import jax.numpy as jnp
import numpy as np
from jax.experimental import pallas as pl
from jax.experimental.pallas import tpu as pltpu


# ----------------------------- Pallas kernel --------------------------------
def _fused_conv_relu_bn_kernel(x_ref, w_ref, pv_ref, o_ref, *, kh, stride, w_width, hw):
    # x_ref : (stride, C, Hh*W)   bf16  row-phase-decomposed zero-padded input (1 batch elem)
    # w_ref : (kh, OC_total, C)   bf16  fused per-tap weights (all branches, zero-embedded)
    # pv_ref: (OC_total, 3)       f32   packed [conv_bias | bn_scale | bn_shift]
    # o_ref : (OC_total, H_out*W) f32   lane-dense output (already NCHW per batch element)
    phases = [x_ref[p] for p in range(stride)]            # each (C, Hh*W), loaded once
    acc = jnp.zeros(o_ref.shape, jnp.float32)
    for j in range(kh):                                   # static unroll, kh is small
        start = (j // stride) * w_width                   # static -> contiguous lane slice
        tap = phases[j % stride][:, start:start + hw]     # (C, H_out*W)
        acc = acc + jnp.dot(w_ref[j], tap, preferred_element_type=jnp.float32)
    bias = pv_ref[:, 0:1]                                 # (OC_total, 1), lane-broadcast
    scale = pv_ref[:, 1:2]
    shift = pv_ref[:, 2:3]
    y = jnp.maximum(acc + bias, 0.0)                      # conv bias + ReLU
    o_ref[...] = y * scale + shift                        # eval-mode BatchNorm (affine)


# --------------------------- SpatialBlock wrapper -----------------------------
def spatial_block(x, branch_params, *, kernel_sizes, padding_values, stride=2, eps=1e-5):
    """branch_params: list of dicts with arrays weight (OC,C,kh,1), bias, gamma, beta,
    rmean, rvar.  kernel_sizes / padding_values / stride are static Python config."""
    n, c, h, w = x.shape
    khs = [ks[0] for ks in kernel_sizes]
    assert all(ks[1] == 1 for ks in kernel_sizes), "branches use (k,1) kernels"
    pads = list(padding_values)
    kh_max = max(khs)
    pad_max = max(pads)
    h_out = (h + 2 * pads[0] - khs[0]) // stride + 1

    # --- fuse all branches into one weight / bias / BN parameter set ---
    w_list, bias_list, scale_list, shift_list = [], [], [], []
    for p, kh_b, p_b in zip(branch_params, khs, pads):
        assert (h + 2 * p_b - kh_b) // stride + 1 == h_out, "branch H_out mismatch"
        off = pad_max - p_b
        assert 0 <= off and off + kh_b <= kh_max, "branch cannot embed in max window"
        wb = p["weight"][:, :, :, 0]                                    # (OC, C, kh_b)
        w_emb = jnp.zeros((wb.shape[0], c, kh_max), wb.dtype)
        w_emb = w_emb.at[:, :, off:off + kh_b].set(wb)                  # zero-embed taps
        w_list.append(w_emb)
        scale = p["gamma"] / jnp.sqrt(p["rvar"] + eps)
        shift = p["beta"] - p["rmean"] * scale
        bias_list.append(p["bias"])
        scale_list.append(scale)
        shift_list.append(shift)

    w_fused = jnp.concatenate(w_list, axis=0)                           # (OC_total, C, kh_max)
    oc_total = w_fused.shape[0]
    w_k = jnp.transpose(w_fused, (2, 0, 1)).astype(jnp.bfloat16)        # (kh_max, OC_total, C)
    pv = jnp.stack(
        [jnp.concatenate(bias_list), jnp.concatenate(scale_list), jnp.concatenate(shift_list)],
        axis=1,
    ).astype(jnp.float32)                                               # (OC_total, 3)

    # --- row-phase decomposition of the zero-padded input (no im2col blow-up) ---
    hh = h_out + (kh_max - 1) // stride          # rows needed per phase
    needed = hh * stride                         # padded rows consumed by the kernel
    pad_top = pad_max
    pad_bottom = max(0, needed - (h + pad_top))
    x_pad = jnp.pad(x, ((0, 0), (0, 0), (pad_top, pad_bottom), (0, 0)))
    x_pad = x_pad[:, :, :needed, :]
    x_ph = x_pad.reshape(n, c, hh, stride, w)
    x_ph = jnp.transpose(x_ph, (0, 3, 1, 2, 4)).reshape(n, stride, c, hh * w)
    x_ph = x_ph.astype(jnp.bfloat16)

    hw = h_out * w
    kernel = functools.partial(
        _fused_conv_relu_bn_kernel, kh=kh_max, stride=stride, w_width=w, hw=hw
    )

    out = pl.pallas_call(
        kernel,
        out_shape=jax.ShapeDtypeStruct((n, oc_total, hw), jnp.float32),
        grid=(n,),
        in_specs=[
            pl.BlockSpec((None, stride, c, hh * w), lambda i: (i, 0, 0, 0)),
            pl.BlockSpec((kh_max, oc_total, c), lambda i: (0, 0, 0)),   # resident weights
            pl.BlockSpec((oc_total, 3), lambda i: (0, 0)),              # resident bias/BN
        ],
        out_specs=pl.BlockSpec((None, oc_total, hw), lambda i: (i, 0, 0)),
        compiler_params=pltpu.CompilerParams(dimension_semantics=("parallel",)),
    )(x_ph, w_k, pv)

    return out.reshape(n, oc_total, h_out, w)                           # NCHW, no transpose


# ------------------------------- reference ------------------------------------
def _reference(x, branch_params, *, kernel_sizes, padding_values, stride=2, eps=1e-5):
    outs = []
    for p, pad in zip(branch_params, padding_values):
        y = jax.lax.conv_general_dilated(
            x, p["weight"], window_strides=(stride, 1),
            padding=((pad, pad), (0, 0)),
            dimension_numbers=("NCHW", "OIHW", "NCHW"),
        )
        y = y + p["bias"][None, :, None, None]
        y = jnp.maximum(y, 0.0)
        scale = p["gamma"] / jnp.sqrt(p["rvar"] + eps)
        shift = p["beta"] - p["rmean"] * scale
        y = y * scale[None, :, None, None] + shift[None, :, None, None]
        outs.append(y)
    return jnp.concatenate(outs, axis=1)


# ---------------------------------- main ---------------------------------------
if __name__ == "__main__":
    in_channels, out_channels = 4, 8
    kernel_sizes = [(3, 1), (5, 1)]     # (kH, kW) per branch; kW=1 keeps W aligned for concat
    padding_values = [1, 2]             # keeps H_out identical across branches
    stride = 2

    key = jax.random.PRNGKey(0)
    kx, kp = jax.random.split(key)
    x = jax.random.normal(kx, (2, in_channels, 16, 16), dtype=jnp.float32)

    params = []
    for b, ((kh, kw), pad) in enumerate(zip(kernel_sizes, padding_values)):
        k_w, k_b, k_g, k_be, k_m, k_v = jax.random.split(jax.random.fold_in(kp, b), 6)
        params.append(dict(
            weight=0.1 * jax.random.normal(k_w, (out_channels, in_channels, kh, kw), jnp.float32),
            bias=0.1 * jax.random.normal(k_b, (out_channels,), jnp.float32),
            gamma=1.0 + 0.1 * jax.random.normal(k_g, (out_channels,), jnp.float32),
            beta=0.1 * jax.random.normal(k_be, (out_channels,), jnp.float32),
            rmean=0.1 * jax.random.normal(k_m, (out_channels,), jnp.float32),
            rvar=1.0 + 0.1 * jax.random.uniform(k_v, (out_channels,), jnp.float32),
        ))

    # TODO(synk): Dropout2d(0.2) / training-mode BatchNorm have no deterministic
    # inference equivalent here; eval-mode semantics implemented (dropout = identity).

    fwd = jax.jit(functools.partial(
        spatial_block, kernel_sizes=kernel_sizes, padding_values=padding_values, stride=stride))
    out = fwd(x, params)
    jax.block_until_ready(out)

    expected_shape = (2, out_channels * len(kernel_sizes), 8, 16)
    assert out.shape == expected_shape, (out.shape, expected_shape)

    ref = _reference(x, params, kernel_sizes=kernel_sizes,
                     padding_values=padding_values, stride=stride)
    np.testing.assert_allclose(np.asarray(out), np.asarray(ref), rtol=2e-2, atol=2e-2)

    print("KERNEL_OK")
</pallas_src>

<mosaic_0001>
module attributes {stable_mosaic.version = 11 : i64} {
  func.func @_fused_conv_relu_bn_kernel(%arg0: i32, %arg1: memref<1x2x4x160xbf16, #tpu.memory_space<vmem>>, %arg2: memref<5x16x4xbf16, #tpu.memory_space<vmem>>, %arg3: memref<16x3xf32, #tpu.memory_space<vmem>>, %arg4: memref<1x16x128xf32, #tpu.memory_space<vmem>>) attributes {dimension_semantics = [#tpu.dimension_semantics<parallel>], iteration_bounds = array<i64: 2>, scalar_prefetch = 0 : i64, scratch_operands = 0 : i64, tpu.core_type = #tpu.core_type<tc>, window_params = [{transform_indices = @transform_0, window_bounds = array<i64: 1, 2, 4, 160>}, {pipeline_mode = #tpu.pipeline_mode<synchronous>, transform_indices = @transform_1, window_bounds = array<i64: 5, 16, 4>}, {pipeline_mode = #tpu.pipeline_mode<synchronous>, transform_indices = @transform_2, window_bounds = array<i64: 16, 3>}, {transform_indices = @transform_3, window_bounds = array<i64: 1, 16, 128>}]} {
    %c0 = arith.constant 0 : index
    %c0_0 = arith.constant 0 : index
    %c0_1 = arith.constant 0 : index
    %c0_2 = arith.constant 0 : index
    %0 = vector.load %arg1[%c0, %c0_0, %c0_1, %c0_2] : memref<1x2x4x160xbf16, #tpu.memory_space<vmem>>, vector<1x1x4x160xbf16>
    %1 = vector.shape_cast %0 : vector<1x1x4x160xbf16> to vector<4x160xbf16>
    %c0_3 = arith.constant 0 : index
    %c1 = arith.constant 1 : index
    %c0_4 = arith.constant 0 : index
    %c0_5 = arith.constant 0 : index
    %2 = vector.load %arg1[%c0_3, %c1, %c0_4, %c0_5] : memref<1x2x4x160xbf16, #tpu.memory_space<vmem>>, vector<1x1x4x160xbf16>
    %3 = vector.shape_cast %2 : vector<1x1x4x160xbf16> to vector<4x160xbf16>
    %cst = arith.constant 0.000000e+00 : f32
    %4 = vector.broadcast %cst : f32 to vector<16x128xf32>
    %5 = vector.extract_strided_slice %1 {offsets = [0, 0], sizes = [4, 128], strides = [1, 1]} : vector<4x160xbf16> to vector<4x128xbf16>
    %c0_6 = arith.constant 0 : index
    %c0_7 = arith.constant 0 : index
    %c0_8 = arith.constant 0 : index
    %6 = vector.load %arg2[%c0_6, %c0_7, %c0_8] : memref<5x16x4xbf16, #tpu.memory_space<vmem>>, vector<1x16x4xbf16>
    %7 = vector.shape_cast %6 : vector<1x16x4xbf16> to vector<16x4xbf16>
    %cst_9 = arith.constant dense<0.000000e+00> : vector<16x128xf32>
    %8 = tpu.matmul %7, %5, %cst_9 {dimension_numbers = #tpu.dot_dimension_numbers<[1], [0], [0], [1], [0, 0, 1, 1], [], []>} : vector<16x4xbf16>, vector<4x128xbf16>, vector<16x128xf32> -> vector<16x128xf32>
    %9 = arith.addf %4, %8 : vector<16x128xf32>
    %10 = vector.extract_strided_slice %3 {offsets = [0, 0], sizes = [4, 128], strides = [1, 1]} : vector<4x160xbf16> to vector<4x128xbf16>
    %c1_10 = arith.constant 1 : index
    %c0_11 = arith.constant 0 : index
    %c0_12 = arith.constant 0 : index
    %11 = vector.load %arg2[%c1_10, %c0_11, %c0_12] : memref<5x16x4xbf16, #tpu.memory_space<vmem>>, vector<1x16x4xbf16>
    %12 = vector.shape_cast %11 : vector<1x16x4xbf16> to vector<16x4xbf16>
    %cst_13 = arith.constant dense<0.000000e+00> : vector<16x128xf32>
    %13 = tpu.matmul %12, %10, %cst_13 {dimension_numbers = #tpu.dot_dimension_numbers<[1], [0], [0], [1], [0, 0, 1, 1], [], []>} : vector<16x4xbf16>, vector<4x128xbf16>, vector<16x128xf32> -> vector<16x128xf32>
    %14 = arith.addf %9, %13 : vector<16x128xf32>
    %15 = vector.extract_strided_slice %1 {offsets = [0, 16], sizes = [4, 128], strides = [1, 1]} : vector<4x160xbf16> to vector<4x128xbf16>
    %c2 = arith.constant 2 : index
    %c0_14 = arith.constant 0 : index
    %c0_15 = arith.constant 0 : index
    %16 = vector.load %arg2[%c2, %c0_14, %c0_15] : memref<5x16x4xbf16, #tpu.memory_space<vmem>>, vector<1x16x4xbf16>
    %17 = vector.shape_cast %16 : vector<1x16x4xbf16> to vector<16x4xbf16>
    %cst_16 = arith.constant dense<0.000000e+00> : vector<16x128xf32>
    %18 = tpu.matmul %17, %15, %cst_16 {dimension_numbers = #tpu.dot_dimension_numbers<[1], [0], [0], [1], [0, 0, 1, 1], [], []>} : vector<16x4xbf16>, vector<4x128xbf16>, vector<16x128xf32> -> vector<16x128xf32>
    %19 = arith.addf %14, %18 : vector<16x128xf32>
    %20 = vector.extract_strided_slice %3 {offsets = [0, 16], sizes = [4, 128], strides = [1, 1]} : vector<4x160xbf16> to vector<4x128xbf16>
    %c3 = arith.constant 3 : index
    %c0_17 = arith.constant 0 : index
    %c0_18 = arith.constant 0 : index
    %21 = vector.load %arg2[%c3, %c0_17, %c0_18] : memref<5x16x4xbf16, #tpu.memory_space<vmem>>, vector<1x16x4xbf16>
    %22 = vector.shape_cast %21 : vector<1x16x4xbf16> to vector<16x4xbf16>
    %cst_19 = arith.constant dense<0.000000e+00> : vector<16x128xf32>
    %23 = tpu.matmul %22, %20, %cst_19 {dimension_numbers = #tpu.dot_dimension_numbers<[1], [0], [0], [1], [0, 0, 1, 1], [], []>} : vector<16x4xbf16>, vector<4x128xbf16>, vector<16x128xf32> -> vector<16x128xf32>
    %24 = arith.addf %19, %23 : vector<16x128xf32>
    %25 = vector.extract_strided_slice %1 {offsets = [0, 32], sizes = [4, 128], strides = [1, 1]} : vector<4x160xbf16> to vector<4x128xbf16>
    %c4 = arith.constant 4 : index
    %c0_20 = arith.constant 0 : index
    %c0_21 = arith.constant 0 : index
    %26 = vector.load %arg2[%c4, %c0_20, %c0_21] : memref<5x16x4xbf16, #tpu.memory_space<vmem>>, vector<1x16x4xbf16>
    %27 = vector.shape_cast %26 : vector<1x16x4xbf16> to vector<16x4xbf16>
    %cst_22 = arith.constant dense<0.000000e+00> : vector<16x128xf32>
    %28 = tpu.matmul %27, %25, %cst_22 {dimension_numbers = #tpu.dot_dimension_numbers<[1], [0], [0], [1], [0, 0, 1, 1], [], []>} : vector<16x4xbf16>, vector<4x128xbf16>, vector<16x128xf32> -> vector<16x128xf32>
    %29 = arith.addf %24, %28 : vector<16x128xf32>
    %c0_23 = arith.constant 0 : index
    %c0_24 = arith.constant 0 : index
    %30 = vector.load %arg3[%c0_23, %c0_24] : memref<16x3xf32, #tpu.memory_space<vmem>>, vector<16x1xf32>
    %c0_25 = arith.constant 0 : index
    %c1_26 = arith.constant 1 : index
    %31 = vector.load %arg3[%c0_25, %c1_26] : memref<16x3xf32, #tpu.memory_space<vmem>>, vector<16x1xf32>
    %c0_27 = arith.constant 0 : index
    %c2_28 = arith.constant 2 : index
    %32 = vector.load %arg3[%c0_27, %c2_28] : memref<16x3xf32, #tpu.memory_space<vmem>>, vector<16x1xf32>
    %33 = vector.broadcast %30 : vector<16x1xf32> to vector<16x128xf32>
    %34 = arith.addf %29, %33 : vector<16x128xf32>
    %cst_29 = arith.constant 0.000000e+00 : f32
    %35 = vector.broadcast %cst_29 : f32 to vector<16x128xf32>
    %36 = arith.maximumf %34, %35 : vector<16x128xf32>
    %37 = vector.broadcast %31 : vector<16x1xf32> to vector<16x128xf32>
    %38 = arith.mulf %36, %37 : vector<16x128xf32>
    %39 = vector.broadcast %32 : vector<16x1xf32> to vector<16x128xf32>
    %40 = arith.addf %38, %39 : vector<16x128xf32>
    %c0_30 = arith.constant 0 : index
    %c0_31 = arith.constant 0 : index
    %c0_32 = arith.constant 0 : index
    %41 = vector.load %arg4[%c0_30, %c0_31, %c0_32] : memref<1x16x128xf32, #tpu.memory_space<vmem>>, vector<1x16x128xf32>
    %42 = vector.shape_cast %41 : vector<1x16x128xf32> to vector<16x128xf32>
    %43 = vector.shape_cast %40 : vector<16x128xf32> to vector<1x16x128xf32>
    tpu.vector_store %arg4[%c0_30, %c0_31, %c0_32], %43 {strides = array<i32>} : memref<1x16x128xf32, #tpu.memory_space<vmem>>, vector<1x16x128xf32>,
    return
  }
  func.func @transform_0(%arg0: i32) -> (i32, i32, i32, i32) {
    %c0_i32 = arith.constant 0 : i32
    %c0_i32_0 = arith.constant 0 : i32
    %c0_i32_1 = arith.constant 0 : i32
    %c0_i32_2 = arith.constant 0 : i32
    return %arg0, %c0_i32, %c0_i32_0, %c0_i32_1 : i32, i32, i32, i32
  }
  func.func @transform_1(%arg0: i32) -> (i32, i32, i32) {
    %c0_i32 = arith.constant 0 : i32
    %c0_i32_0 = arith.constant 0 : i32
    %c0_i32_1 = arith.constant 0 : i32
    %c0_i32_2 = arith.constant 0 : i32
    return %c0_i32, %c0_i32_0, %c0_i32_1 : i32, i32, i32
  }
  func.func @transform_2(%arg0: i32) -> (i32, i32) {
    %c0_i32 = arith.constant 0 : i32
    %c0_i32_0 = arith.constant 0 : i32
    %c0_i32_1 = arith.constant 0 : i32
    return %c0_i32, %c0_i32_0 : i32, i32
  }
  func.func @transform_3(%arg0: i32) -> (i32, i32, i32) {
    %c0_i32 = arith.constant 0 : i32
    %c0_i32_0 = arith.constant 0 : i32
    %c0_i32_1 = arith.constant 0 : i32
    return %arg0, %c0_i32, %c0_i32_0 : i32, i32, i32
  }
}

</mosaic_0001>

<llo_original>
// kernel: spatial_block.1
$region0: #{spatial_block.1}
  #allocation0 [shape = 'u32[]', space=smem, size = 0x4, offset = 0x4, fixed_abs, tag = 'smem constant byte address 0x4 - core index']
  #allocation1 [shape = 'u32[144,128]{1,0:T(1,128)}', space=vmem, size = 0x12000, scoped, tag = 'internal scratch']
  %s0 = inlined_call_operand.vmem [shape: bf16[2,2,4,160], index: 0, kind: input, shape index: {}]
  %s1 = inlined_call_operand.vmem [shape: bf16[5,16,4], index: 1, kind: input, shape index: {}]
  %s2 = inlined_call_operand.vmem [shape: f32[16,3], index: 2, kind: input, shape index: {}]
  %s3 = inlined_call_operand.vmem [shape: f32[2,16,128], index: 3, kind: output, shape index: {}]
  %s4 = sld [smem:[#allocation0]]
  $region45: #{spatial_block.1} parent=0
    _
  %s6 = ssub.s32 1, %s4
  %s7 = scalar_select 0, %s6, %s4
  loop: start=0, step=1, limit=4
  $region2: #{spatial_block.1} parent=0 // loop_pre_header
    _
  $region3: #{spatial_block.1} parent=0 // loop_header
    %s9 = sphi 0, %s13
    %p10 = scmp.ge.s32.totalorder %s9, 4
    %s19 = sphi 0, %s21
    %s22 = sphi 0, %s19
    %s23 = sphi 0, %s22
    %s39 = sphi 0, %s23
    %s43 = sphi 0, %s43
    %s45 = sphi 0, %s43
    %s46 = sphi 0, %s45
    %s60 = sphi 0, %s46
    %s64 = sphi 0, %s64
    %s66 = sphi 0, %s64
    %s67 = sphi 0, %s66
    %s81 = sphi 0, %s67
    %s87 = sphi 0, %s89
    %s90 = sphi 0, %s87
    %s91 = sphi 0, %s90
    %s107 = sphi 0, %s91
  $region4: #{spatial_block.1} parent=0 // loop_header_branch
    %12 = sbr.rel (%p10) target = $region8
  $region5: #{spatial_block.1} parent=0 // loop_body
    %s14 = ssub.s32 %s9, 1
    %s15 = ssub.s32 %s9, 2
    %s16 = sadd.s32 %s9, 1
    %s17 = ssub.s32 %s9, %s16
    %p18 = scmp.eq.s32.totalorder %s17, 0
    %s20 = sadd.s32 %s19, 1
    %s21 = scalar_select %p18, %s19, %s20
    %p24 = pneg %p18
    %p25 = scmp.eq.s32.totalorder %s9, 1
    %p26 = por %p24, %p25
    %p27 = scmp.ne.s32.totalorder %s19, %s22
    %p28 = scmp.eq.s32.totalorder %s9, 0
    %p29 = por %p27, %p28
    %p30 = scmp.ne.s32.totalorder %s19, %s22
    %p31 = scmp.eq.s32.totalorder %s14, 1
    %p32 = por %p30, %p31
    %p33 = scmp.ne.s32.totalorder %s22, %s23
    %p34 = scmp.eq.s32.totalorder %s14, 0
    %p35 = por %p33, %p34
    %p36 = scmp.ne.s32.totalorder %s22, %s23
    %p37 = scmp.eq.s32.totalorder %s15, 1
    %p38 = por %p36, %p37
    %p40 = scmp.ne.s32.totalorder %s23, %s39
    %p41 = scmp.eq.s32.totalorder %s15, 0
    %p42 = por %p40, %p41
    %s44 = sadd.s32 %s43, 1
    %p47 = scmp.eq.s32.totalorder %s9, 1
    %p48 = scmp.ne.s32.totalorder %s43, %s45
    %p49 = scmp.eq.s32.totalorder %s9, 0
    %p50 = por %p48, %p49
    %p51 = scmp.ne.s32.totalorder %s43, %s45
    %p52 = scmp.eq.s32.totalorder %s14, 1
    %p53 = por %p51, %p52
    %p54 = scmp.ne.s32.totalorder %s45, %s46
    %p55 = scmp.eq.s32.totalorder %s14, 0
    %p56 = por %p54, %p55
    %p57 = scmp.ne.s32.totalorder %s45, %s46
    %p58 = scmp.eq.s32.totalorder %s15, 1
    %p59 = por %p57, %p58
    %p61 = scmp.ne.s32.totalorder %s46, %s60
    %p62 = scmp.eq.s32.totalorder %s15, 0
    %p63 = por %p61, %p62
    %s65 = sadd.s32 %s64, 1
    %p68 = scmp.eq.s32.totalorder %s9, 1
    %p69 = scmp.ne.s32.totalorder %s64, %s66
    %p70 = scmp.eq.s32.totalorder %s9, 0
    %p71 = por %p69, %p70
    %p72 = scmp.ne.s32.totalorder %s64, %s66
    %p73 = scmp.eq.s32.totalorder %s14, 1
    %p74 = por %p72, %p73
    %p75 = scmp.ne.s32.totalorder %s66, %s67
    %p76 = scmp.eq.s32.totalorder %s14, 0
    %p77 = por %p75, %p76
    %p78 = scmp.ne.s32.totalorder %s66, %s67
    %p79 = scmp.eq.s32.totalorder %s15, 1
    %p80 = por %p78, %p79
    %p82 = scmp.ne.s32.totalorder %s67, %s81
    %p83 = scmp.eq.s32.totalorder %s15, 0
    %p84 = por %p82, %p83
    %s85 = ssub.s32 %s9, %s16
    %p86 = scmp.eq.s32.totalorder %s85, 0
    %s88 = sadd.s32 %s87, 1
    %s89 = scalar_select %p86, %s87, %s88
    %p92 = pneg %p86
    %p93 = scmp.eq.s32.totalorder %s9, 1
    %p94 = por %p92, %p93
    %p95 = scmp.ne.s32.totalorder %s87, %s90
    %p96 = scmp.eq.s32.totalorder %s9, 0
    %p97 = por %p95, %p96
    %p98 = scmp.ne.s32.totalorder %s87, %s90
    %p99 = scmp.eq.s32.totalorder %s14, 1
    %p100 = por %p98, %p99
    %p101 = scmp.ne.s32.totalorder %s90, %s91
    %p102 = scmp.eq.s32.totalorder %s14, 0
    %p103 = por %p101, %p102
    %p104 = scmp.ne.s32.totalorder %s90, %s91
    %p105 = scmp.eq.s32.totalorder %s15, 1
    %p106 = por %p104, %p105
    %p108 = scmp.ne.s32.totalorder %s91, %s107
    %p109 = scmp.eq.s32.totalorder %s15, 0
    %p110 = por %p108, %p109
    %p111 = scmp.le.s32.totalorder 1, %s9
    %p112 = scmp.lt.s32.totalorder %s9, 3
    %p113 = pnand %p111, %p112
    %p114 = pneg %p113
    // Predicated region
    $region9: #{spatial_block.1} parent=5 // pred_check
      _
    $region10: #{spatial_block.1} parent=5 // pred_check_branch
      %116 = sbr.rel (%p113) target = $region12
    $region11: #{spatial_block.1} parent=5 // pred_region
      %s117 = ssub.s32 %s9, 1
      // Predicated region
      $region13: #{spatial_block.1} parent=11 // pred_check
        %p118 = pneg %p56
      $region14: #{spatial_block.1} parent=11 // pred_check_branch
        %120 = sbr.rel (%p118) target = $region16
      $region15: #{spatial_block.1} parent=11 // pred_region
        _
      $region16: #{spatial_block.1} parent=11 // pred_fallthru
        _
      // Predicated region
      $region17: #{spatial_block.1} parent=11 // pred_check
        %p121 = pneg %p77
      $region18: #{spatial_block.1} parent=11 // pred_check_branch
        %123 = sbr.rel (%p121) target = $region20
      $region19: #{spatial_block.1} parent=11 // pred_region
        _
      $region20: #{spatial_block.1} parent=11 // pred_fallthru
        _
    $region12: #{spatial_block.1} parent=5 // pred_fallthru
      _
    %p124 = scmp.lt.s32.totalorder %s9, 2
    // Predicated region
    $region21: #{spatial_block.1} parent=5 // pred_check
      %p125 = pneg %p124
    $region22: #{spatial_block.1} parent=5 // pred_check_branch
      %127 = sbr.rel (%p125) target = $region24
    $region23: #{spatial_block.1} parent=5 // pred_region
      // Predicated region
      $region25: #{spatial_block.1} parent=23 // pred_check
        %p128 = pneg %p29
      $region26: #{spatial_block.1} parent=23 // pred_check_branch
        %130 = sbr.rel (%p128) target = $region28
      $region27: #{spatial_block.1} parent=23 // pred_region
        %p131 = scmp.lt.s32.totalorder %s9, 1
        %s132 = scalar_select %p131, %s9, 1
        %s133 = smul.addr %s132, 4
        %s134 = smul.addr %s133, 2
        %s135 = scalar_lea.vmem %s0, %s134
      $region28: #{spatial_block.1} parent=23 // pred_fallthru
        _
    $region24: #{spatial_block.1} parent=5 // pred_fallthru
      _
    %p136 = scmp.le.s32.totalorder 1, %s9
    %p137 = scmp.lt.s32.totalorder %s9, 3
    %p138 = pnand %p136, %p137
    %p139 = pneg %p138
    // Predicated region
    $region29: #{spatial_block.1} parent=5 // pred_check
      _
    $region30: #{spatial_block.1} parent=5 // pred_check_branch
      %141 = sbr.rel (%p138) target = $region32
    $region31: #{spatial_block.1} parent=5 // pred_region
      %s142 = ssub.s32 %s9, 1
      %p143 = scmp.lt.s32.totalorder %s14, 1
      %s144 = scalar_select %p143, %s14, 1
      %s145 = smul.addr %s144, 4
      %s146 = smul.addr %s145, 2
      %s147 = scalar_lea.vmem %s0, %s146
      %p148 = pneg %p35
      %p149 = pneg %p32
      %p150 = pneg %p56
      %p151 = pneg %p53
      %p152 = pneg %p77
      %p153 = pneg %p74
      %p154 = pneg %p103
      %p155 = pneg %p100
      %p156 = scmp.lt.s32.totalorder %s14, 1
      %s157 = scalar_select %p156, %s14, 1
      %s158 = smul.addr %s157, 2
      %s159 = smul.addr %s158, 8
      %s160 = scalar_lea.vmem %s3, %s159
      %p161 = scmp.lt.s32.totalorder %s14, 1
      %s162 = scalar_select %p161, %s14, 1
      %s163 = smul.addr %s162, 4
      %s164 = smul.addr %s163, 2
      %s165 = scalar_lea.vmem %s0, %s164
      %p166 = scmp.lt.s32.totalorder %s14, 1
      %s167 = scalar_select %p166, %s14, 1
      %s168 = smul.addr %s167, 2
      %s169 = smul.addr %s168, 8
      %s170 = scalar_lea.vmem %s3, %s169
      %v172 = vld [vmem:[%s165] sm:$0xf]
      %s173 = scalar_lea.vmem %s165, 4
      %v174 = vld [vmem:[%s173] sm:$0xf]
      %v175 = vld [vmem:[%s1] sm:$0xf]
      %v176 = vld [vmem:[%s1 + $0x4] sm:$0xf]
      %s177 = scalar_lea.vmem %s1, 8
      %v178 = vld [vmem:[%s177] sm:$0xf]
      %v179 = vld [vmem:[%s177 + $0x4] sm:$0xf]
      %v182 = vunpack.c.l.b16 %v178
      %v183 = vunpack.c.l.b16 %v179
      %v184 = vpack.c.b16 %v183, %v182
      %vm185 = vcmask 31744
      %v187 = vsel %vm185, %v184, 0
      %vm189 = vcmask 1041408
      %v191 = vsel %vm189, %v174, 0
      %193 = vmatprep.subr.bf16.mxu0 0
      %194 = vmatpush1.bf16.msra.mxu0 0
      %195 = vmatprep.subr.bf16.mxu0 0
      %196 = vmatpush1.bf16.msra.mxu0 0
      %197 = vmatprep.subr.bf16.mxu0 0
      %198 = vmatpush1.bf16.msra.mxu0 0
      %199 = vmatprep.subr.bf16.mxu0 0
      %200 = vmatpush1.bf16.msra.mxu0 0
      %201 = vmatprep.subr.bf16.mxu0 0
      %202 = vmatpush1.bf16.msra.mxu0 0
      %203 = vmatprep.subr.bf16.mxu0 0
      %204 = vmatpush1.bf16.msra.mxu0 0
      %205 = vmatprep.subr.bf16.mxu0 0
      %206 = vmatpush1.bf16.msra.mxu0 0
      %207 = vmatprep.subr.bf16.mxu0 0
      %208 = vmatpush1.bf16.msra.mxu0 %v191
      %209 = vmatprep.subr.bf16.mxu0 0
      %210 = vmatpush2.bf16.msra.mxu0 0
      %211 = vmatprep.subr.bf16.mxu0 0
      %212 = vmatpush2.bf16.msra.mxu0 0
      %213 = vmatprep.subr.bf16.mxu0 0
      %214 = vmatpush2.bf16.msra.mxu0 0
      %215 = vmatprep.subr.bf16.mxu0 0
      %216 = vmatpush2.bf16.msra.mxu0 0
      %217 = vmatprep.subr.bf16.mxu0 0
      %218 = vmatpush2.bf16.msra.mxu0 0
      %219 = vmatprep.subr.bf16.mxu0 0
      %220 = vmatpush2.bf16.msra.mxu0 0
      %221 = vmatprep.subr.bf16.mxu0 0
      %222 = vmatpush2.bf16.msra.mxu0 0
      %223 = vmatprep.subr.bf16.mxu0 0
      %224 = vmatpush2.bf16.msra.mxu0 0
      %225 = vmatprep.mubr.bf16.mxu0 0
      %226 = vmatmul.mubr.bf16.gmra.mxu0 %v187
      %v227 = vpop.f32.mrf.mxu0
      %v228 = vadd.f32 0.0, %v227
      %v229 = vpop.f32.mrf.mxu0
      %v230 = vpop.f32.mrf.mxu0
      %v231 = vadd.f32 0.0, %v230
      %v232 = vpop.f32.mrf.mxu0
      %233 = vdwg.mxu0
      %v236 = vunpack.c.l.b16 %v175
      %v237 = vunpack.c.l.b16 %v176
      %v238 = vpack.c.b16 %v237, %v236
      %v240 = vsel %vm185, %v238, 0
      %v243 = vsel %vm189, %v172, 0
      %245 = vmatprep.subr.bf16.mxu0 0
      %246 = vmatpush1.bf16.msra.mxu0 0
      %247 = vmatprep.subr.bf16.mxu0 0
      %248 = vmatpush1.bf16.msra.mxu0 0
      %249 = vmatprep.subr.bf16.mxu0 0
      %250 = vmatpush1.bf16.msra.mxu0 0
      %251 = vmatprep.subr.bf16.mxu0 0
      %252 = vmatpush1.bf16.msra.mxu0 0
      %253 = vmatprep.subr.bf16.mxu0 0
      %254 = vmatpush1.bf16.msra.mxu0 0
      %255 = vmatprep.subr.bf16.mxu0 0
      %256 = vmatpush1.bf16.msra.mxu0 0
      %257 = vmatprep.subr.bf16.mxu0 0
      %258 = vmatpush1.bf16.msra.mxu0 0
      %259 = vmatprep.subr.bf16.mxu0 0
      %260 = vmatpush1.bf16.msra.mxu0 %v243
      %261 = vmatprep.subr.bf16.mxu0 0
      %262 = vmatpush2.bf16.msra.mxu0 0
      %263 = vmatprep.subr.bf16.mxu0 0
      %264 = vmatpush2.bf16.msra.mxu0 0
      %265 = vmatprep.subr.bf16.mxu0 0
      %266 = vmatpush2.bf16.msra.mxu0 0
      %267 = vmatprep.subr.bf16.mxu0 0
      %268 = vmatpush2.bf16.msra.mxu0 0
      %269 = vmatprep.subr.bf16.mxu0 0
      %270 = vmatpush2.bf16.msra.mxu0 0
      %271 = vmatprep.subr.bf16.mxu0 0
      %272 = vmatpush2.bf16.msra.mxu0 0
      %273 = vmatprep.subr.bf16.mxu0 0
      %274 = vmatpush2.bf16.msra.mxu0 0
      %275 = vmatprep.subr.bf16.mxu0 0
      %276 = vmatpush2.bf16.msra.mxu0 0
      %277 = vmatprep.mubr.bf16.mxu0 0
      %278 = vmatmul.mubr.bf16.gmra.mxu0 %v240
      %v279 = vpop.f32.mrf.mxu0
      %v280 = vadd.f32 %v228, %v279
      %v281 = vpop.f32.mrf.mxu0
      %v282 = vpop.f32.mrf.mxu0
      %v283 = vadd.f32 %v231, %v282
      %v284 = vpop.f32.mrf.mxu0
      %285 = vdwg.mxu0
      %s286 = scalar_lea.vmem %s1, 16
      %v287 = vld [vmem:[%s286] sm:$0xf]
      %v288 = vld [vmem:[%s286 + $0x4] sm:$0xf]
      %v291 = vunpack.c.l.b16 %v287
      %v292 = vunpack.c.l.b16 %v288
      %v293 = vpack.c.b16 %v292, %v291
      %v296 = vunpack.c.l.s4 1983009808
      %v297 = vunpack.c.0.s8 %v296
      %v298 = vlaneseq
      %v299 = vshrl.u32 %v298, 7
      %v300 = vsub.s32 %v297, %v299
      %v301 = vrot.slane %v172, %v300
      %v302 = vcombine.high %v301, %v301
      %303 = vrot.lane.b32.xlu0 %v301, 112
      %v304 = vpop.permute.xlu0 %303
      %305 = vrot.lane.b32.xlu0 %v302, 112
      %v306 = vpop.permute.xlu0 %305
      %vm307 = vcmask 916480
      %v308 = vsel %vm307, %v304, %v306
      %v310 = vsel %vm185, %v293, 0
      %v313 = vsel %vm189, %v308, 0
      %315 = vmatprep.subr.bf16.mxu0 0
      %316 = vmatpush1.bf16.msra.mxu0 0
      %317 = vmatprep.subr.bf16.mxu0 0
      %318 = vmatpush1.bf16.msra.mxu0 0
      %319 = vmatprep.subr.bf16.mxu0 0
      %320 = vmatpush1.bf16.msra.mxu0 0
      %321 = vmatprep.subr.bf16.mxu0 0
      %322 = vmatpush1.bf16.msra.mxu0 0
      %323 = vmatprep.subr.bf16.mxu0 0
      %324 = vmatpush1.bf16.msra.mxu0 0
      %325 = vmatprep.subr.bf16.mxu0 0
      %326 = vmatpush1.bf16.msra.mxu0 0
      %327 = vmatprep.subr.bf16.mxu0 0
      %328 = vmatpush1.bf16.msra.mxu0 0
      %329 = vmatprep.subr.bf16.mxu0 0
      %330 = vmatpush1.bf16.msra.mxu0 %v313
      %331 = vmatprep.subr.bf16.mxu0 0
      %332 = vmatpush2.bf16.msra.mxu0 0
      %333 = vmatprep.subr.bf16.mxu0 0
      %334 = vmatpush2.bf16.msra.mxu0 0
      %335 = vmatprep.subr.bf16.mxu0 0
      %336 = vmatpush2.bf16.msra.mxu0 0
      %337 = vmatprep.subr.bf16.mxu0 0
      %338 = vmatpush2.bf16.msra.mxu0 0
      %339 = vmatprep.subr.bf16.mxu0 0
      %340 = vmatpush2.bf16.msra.mxu0 0
      %341 = vmatprep.subr.bf16.mxu0 0
      %342 = vmatpush2.bf16.msra.mxu0 0
      %343 = vmatprep.subr.bf16.mxu0 0
      %344 = vmatpush2.bf16.msra.mxu0 0
      %345 = vmatprep.subr.bf16.mxu0 0
      %346 = vmatpush2.bf16.msra.mxu0 0
      %347 = vmatprep.mubr.bf16.mxu0 0
      %348 = vmatmul.mubr.bf16.gmra.mxu0 %v310
      %v349 = vpop.f32.mrf.mxu0
      %v350 = vadd.f32 0.0, %v349
      %v351 = vpop.f32.mrf.mxu0
      %v352 = vpop.f32.mrf.mxu0
      %v353 = vadd.f32 0.0, %v352
      %v354 = vpop.f32.mrf.mxu0
      %355 = vdwg.mxu0
      %v356 = vadd.f32 %v280, %v350
      %v357 = vadd.f32 %v283, %v353
      %s358 = scalar_lea.vmem %s1, 24
      %v359 = vld [vmem:[%s358] sm:$0xf]
      %v360 = vld [vmem:[%s358 + $0x4] sm:$0xf]
      %v363 = vunpack.c.l.b16 %v359
      %v364 = vunpack.c.l.b16 %v360
      %v365 = vpack.c.b16 %v364, %v363
      %v368 = vunpack.c.l.s4 1983009808
      %v369 = vunpack.c.0.s8 %v368
      %v370 = vlaneseq
      %v371 = vshrl.u32 %v370, 7
      %v372 = vsub.s32 %v369, %v371
      %v373 = vrot.slane %v174, %v372
      %v374 = vcombine.high %v373, %v373
      %375 = vrot.lane.b32.xlu0 %v373, 112
      %v376 = vpop.permute.xlu0 %375
      %377 = vrot.lane.b32.xlu0 %v374, 112
      %v378 = vpop.permute.xlu0 %377
      %v379 = vsel %vm307, %v376, %v378
      %v381 = vsel %vm185, %v365, 0
      %v384 = vsel %vm189, %v379, 0
      %386 = vmatprep.subr.bf16.mxu0 0
      %387 = vmatpush1.bf16.msra.mxu0 0
      %388 = vmatprep.subr.bf16.mxu0 0
      %389 = vmatpush1.bf16.msra.mxu0 0
      %390 = vmatprep.subr.bf16.mxu0 0
      %391 = vmatpush1.bf16.msra.mxu0 0
      %392 = vmatprep.subr.bf16.mxu0 0
      %393 = vmatpush1.bf16.msra.mxu0 0
      %394 = vmatprep.subr.bf16.mxu0 0
      %395 = vmatpush1.bf16.msra.mxu0 0
      %396 = vmatprep.subr.bf16.mxu0 0
      %397 = vmatpush1.bf16.msra.mxu0 0
      %398 = vmatprep.subr.bf16.mxu0 0
      %399 = vmatpush1.bf16.msra.mxu0 0
      %400 = vmatprep.subr.bf16.mxu0 0
      %401 = vmatpush1.bf16.msra.mxu0 %v384
      %402 = vmatprep.subr.bf16.mxu0 0
      %403 = vmatpush2.bf16.msra.mxu0 0
      %404 = vmatprep.subr.bf16.mxu0 0
      %405 = vmatpush2.bf16.msra.mxu0 0
      %406 = vmatprep.subr.bf16.mxu0 0
      %407 = vmatpush2.bf16.msra.mxu0 0
      %408 = vmatprep.subr.bf16.mxu0 0
      %409 = vmatpush2.bf16.msra.mxu0 0
      %410 = vmatprep.subr.bf16.mxu0 0
      %411 = vmatpush2.bf16.msra.mxu0 0
      %412 = vmatprep.subr.bf16.mxu0 0
      %413 = vmatpush2.bf16.msra.mxu0 0
      %414 = vmatprep.subr.bf16.mxu0 0
      %415 = vmatpush2.bf16.msra.mxu0 0
      %416 = vmatprep.subr.bf16.mxu0 0
      %417 = vmatpush2.bf16.msra.mxu0 0
      %418 = vmatprep.mubr.bf16.mxu0 0
      %419 = vmatmul.mubr.bf16.gmra.mxu0 %v381
      %v420 = vpop.f32.mrf.mxu0
      %v421 = vadd.f32 0.0, %v420
      %v422 = vpop.f32.mrf.mxu0
      %v423 = vpop.f32.mrf.mxu0
      %v424 = vadd.f32 0.0, %v423
      %v425 = vpop.f32.mrf.mxu0
      %426 = vdwg.mxu0
      %v427 = vadd.f32 %v356, %v421
      %v428 = vadd.f32 %v357, %v424
      %s429 = scalar_lea.vmem %s1, 32
      %v430 = vld [vmem:[%s429] sm:$0xf]
      %v431 = vld [vmem:[%s429 + $0x4] sm:$0xf]
      %v434 = vunpack.c.l.b16 %v430
      %v435 = vunpack.c.l.b16 %v431
      %v436 = vpack.c.b16 %v435, %v434
      %437 = vrot.lane.b32.xlu0 %v301, 96
      %v438 = vpop.permute.xlu0 %437
      %439 = vrot.lane.b32.xlu0 %v302, 96
      %v440 = vpop.permute.xlu0 %439
      %vm441 = vcmask 785408
      %v442 = vsel %vm441, %v438, %v440
      %v444 = vsel %vm185, %v436, 0
      %v447 = vsel %vm189, %v442, 0
      %449 = vmatprep.subr.bf16.mxu0 0
      %450 = vmatpush1.bf16.msra.mxu0 0
      %451 = vmatprep.subr.bf16.mxu0 0
      %452 = vmatpush1.bf16.msra.mxu0 0
      %453 = vmatprep.subr.bf16.mxu0 0
      %454 = vmatpush1.bf16.msra.mxu0 0
      %455 = vmatprep.subr.bf16.mxu0 0
      %456 = vmatpush1.bf16.msra.mxu0 0
      %457 = vmatprep.subr.bf16.mxu0 0
      %458 = vmatpush1.bf16.msra.mxu0 0
      %459 = vmatprep.subr.bf16.mxu0 0
      %460 = vmatpush1.bf16.msra.mxu0 0
      %461 = vmatprep.subr.bf16.mxu0 0
      %462 = vmatpush1.bf16.msra.mxu0 0
      %463 = vmatprep.subr.bf16.mxu0 0
      %464 = vmatpush1.bf16.msra.mxu0 %v447
      %465 = vmatprep.subr.bf16.mxu0 0
      %466 = vmatpush2.bf16.msra.mxu0 0
      %467 = vmatprep.subr.bf16.mxu0 0
      %468 = vmatpush2.bf16.msra.mxu0 0
      %469 = vmatprep.subr.bf16.mxu0 0
      %470 = vmatpush2.bf16.msra.mxu0 0
      %471 = vmatprep.subr.bf16.mxu0 0
      %472 = vmatpush2.bf16.msra.mxu0 0
      %473 = vmatprep.subr.bf16.mxu0 0
      %474 = vmatpush2.bf16.msra.mxu0 0
      %475 = vmatprep.subr.bf16.mxu0 0
      %476 = vmatpush2.bf16.msra.mxu0 0
      %477 = vmatprep.subr.bf16.mxu0 0
      %478 = vmatpush2.bf16.msra.mxu0 0
      %479 = vmatprep.subr.bf16.mxu0 0
      %480 = vmatpush2.bf16.msra.mxu0 0
      %481 = vmatprep.mubr.bf16.mxu0 0
      %482 = vmatmul.mubr.bf16.gmra.mxu0 %v444
      %v483 = vpop.f32.mrf.mxu0
      %v484 = vadd.f32 0.0, %v483
      %v485 = vpop.f32.mrf.mxu0
      %v486 = vpop.f32.mrf.mxu0
      %v487 = vadd.f32 0.0, %v486
      %v488 = vpop.f32.mrf.mxu0
      %489 = vdwg.mxu0
      %v490 = vadd.f32 %v427, %v484
      %v491 = vadd.f32 %v428, %v487
      %v492 = vld [vmem:[%s2] sm:$0xff]
      %v493 = vld [vmem:[%s2 + $0x8] sm:$0xff]
      %495 = vset.pattern.permute.xlu0 0
      %496 = vperm.xlu0 %495, %v492
      %v497 = vpop.permute.xlu0 %496
      %500 = vset.pattern.permute.xlu0 0
      %501 = vperm.xlu0 %500, %v493
      %v502 = vpop.permute.xlu0 %501
      %v504 = vadd.f32 %v490, %v497
      %v505 = vadd.f32 %v491, %v502
      %v506 = vmax.f32 %v504, 0.0
      %v507 = vmax.f32 %v505, 0.0
      %508 = vset.pattern.permute.xlu0 1
      %509 = vperm.xlu0 %508, %v492
      %v510 = vpop.permute.xlu0 %509
      %512 = vset.pattern.permute.xlu0 1
      %513 = vperm.xlu0 %512, %v493
      %v514 = vpop.permute.xlu0 %513
      %v516 = vmul.f32 %v506, %v510
      %v517 = vmul.f32 %v507, %v514
      %518 = vset.pattern.permute.xlu0 2
      %519 = vperm.xlu0 %518, %v492
      %v520 = vpop.permute.xlu0 %519
      %522 = vset.pattern.permute.xlu0 2
      %523 = vperm.xlu0 %522, %v493
      %v524 = vpop.permute.xlu0 %523
      %v526 = vadd.f32 %v516, %v520
      %v527 = vadd.f32 %v517, %v524
      %528 = vst [vmem:[%s170] sm:$0xff] %v526
      %529 = vst [vmem:[%s170 + $0x8] sm:$0xff] %v527
      %p530 = scmp.lt.s32.totalorder %s14, 1
      %s531 = scalar_select %p530, %s14, 1
      %s532 = smul.addr %s531, 2
      %s533 = smul.addr %s532, 8
      %s534 = scalar_lea.vmem %s3, %s533
      // Predicated region
      $region33: #{spatial_block.1} parent=31 // pred_check
        %p535 = pneg %p100
      $region34: #{spatial_block.1} parent=31 // pred_check_branch
        %537 = sbr.rel (%p535) target = $region36
      $region35: #{spatial_block.1} parent=31 // pred_region
        _
      $region36: #{spatial_block.1} parent=31 // pred_fallthru
        _
    $region32: #{spatial_block.1} parent=5 // pred_fallthru
      _
    %p538 = scmp.le.s32.totalorder 2, %s9
    // Predicated region
    $region37: #{spatial_block.1} parent=5 // pred_check
      %p539 = pneg %p538
    $region38: #{spatial_block.1} parent=5 // pred_check_branch
      %541 = sbr.rel (%p539) target = $region40
    $region39: #{spatial_block.1} parent=5 // pred_region
      %s542 = ssub.s32 %s9, 2
      // Predicated region
      $region41: #{spatial_block.1} parent=39 // pred_check
        %p543 = pneg %p106
      $region42: #{spatial_block.1} parent=39 // pred_check_branch
        %545 = sbr.rel (%p543) target = $region44
      $region43: #{spatial_block.1} parent=39 // pred_region
        %p546 = scmp.lt.s32.totalorder %s15, 1
        %s547 = scalar_select %p546, %s15, 1
        %s548 = smul.addr %s547, 2
        %s549 = smul.addr %s548, 8
        %s550 = scalar_lea.vmem %s3, %s549
      $region44: #{spatial_block.1} parent=39 // pred_fallthru
        _
    $region40: #{spatial_block.1} parent=5 // pred_fallthru
      _
  $region6: #{spatial_block.1} parent=0 // loop_footer
    %s13 = sadd.s32 1, %s9
  $region7: #{spatial_block.1} parent=0 // loop_footer_branch
    %8 = sbr.rel target = $region3
  $region8: #{spatial_block.1} parent=0 // loop_exit
    _

</llo_original>
